<compile_context>
chip_gen: v5e
topology: v5e:2x2
jax: 0.10.0
libtpu: 0.0.40
codegen_flags: <defaults>
</compile_context>

<pallas_src>
import jax
import jax.numpy as jnp
from jax import lax
from jax.experimental import pallas as pl
from jax.experimental.pallas import tpu as pltpu


def ret_attention_kernel(q_ref, k_ref, v_ref, mask_ref, o_ref, acc_ref, rsum_ref):
    kv_step = pl.program_id(3)

    @pl.when(kv_step == 0)
    def _init():
        acc_ref[...] = jnp.zeros_like(acc_ref)
        rsum_ref[...] = jnp.zeros_like(rsum_ref)

    q = q_ref[0, 0]        # (TQ, D)
    k = k_ref[0, 0]        # (TK, D)
    v = v_ref[0, 0]        # (TK, D)
    m = mask_ref[0, 0]     # (TQ, TK)

    # qk_tile = q @ k^T expressed as a contraction over D (no k.T materialized).
    qk = lax.dot_general(
        q, k,
        dimension_numbers=(((1,), (1,)), ((), ())),
        preferred_element_type=jnp.float32,
    )
    qkm = qk * m                                            # (TQ, TK), f32

    # Accumulate abs-sum (normalizer) and un-normalized output tile.
    rsum_ref[...] += jnp.sum(jnp.abs(qkm), axis=-1, keepdims=True)
    acc_ref[...] += jnp.dot(
        qkm.astype(v.dtype), v, preferred_element_type=jnp.float32
    )

    @pl.when(kv_step == pl.num_programs(3) - 1)
    def _finalize():
        r = jnp.maximum(rsum_ref[...], 1.0)                 # clamp(min=1.0)
        # (qkm @ v) / r == (qkm / r) @ v exactly (r is per-row); divide only
        # touches the (TQ, D) output tile.
        o = acc_ref[...] * pl.reciprocal(r, approx=False)
        o_ref[0, 0] = o.astype(o_ref.dtype)


def _pick_tile(dim, cap, align):
    """Largest tile <= cap that divides dim and is a multiple of `align`
    (or the full dim if dim <= cap / no aligned divisor exists)."""
    if dim <= cap:
        return dim
    t = (cap // align) * align
    while t >= align and dim % t != 0:
        t -= align
    return t if t >= align else dim


def ret_attention(q, k, v, mask):
    B, H, Sq, D = q.shape
    Sk = k.shape[2]
    assert k.shape == (B, H, Sk, D)
    assert v.shape == (B, H, Sk, D)
    assert mask.shape == (B, H, Sq, Sk)

    # Tile caps chosen to fit v7x's 64 MiB VMEM while staying large enough
    # to hide DMA on v5e/v6e.
    TQ = _pick_tile(Sq, 256, 8)     # sublane-aligned query tile
    TK = _pick_tile(Sk, 512, 128)   # lane-aligned key/value tile
    assert Sq % TQ == 0 and Sk % TK == 0

    grid = (B, H, Sq // TQ, Sk // TK)

    itemsize = jnp.dtype(q.dtype).itemsize
    block_bytes = (TQ * D + 2 * TK * D + TQ * TK + TQ * D) * itemsize
    # ~2x double-buffered block footprint, clamped to sane bounds.
    vmem_limit = int(min(64 * 2**20, max(16 * 2**20, 4 * block_bytes)))

    return pl.pallas_call(
        ret_attention_kernel,
        out_shape=jax.ShapeDtypeStruct((B, H, Sq, D), q.dtype),
        grid_spec=pltpu.PrefetchScalarGridSpec(
            num_scalar_prefetch=0,
            grid=grid,
            in_specs=[
                # q / mask / out advance with the Sq-tile index; k / v advance
                # with the Sk-tile index and stay resident across Sq tiles.
                pl.BlockSpec((1, 1, TQ, D), lambda b, h, i, j: (b, h, i, 0)),
                pl.BlockSpec((1, 1, TK, D), lambda b, h, i, j: (b, h, j, 0)),
                pl.BlockSpec((1, 1, TK, D), lambda b, h, i, j: (b, h, j, 0)),
                pl.BlockSpec((1, 1, TQ, TK), lambda b, h, i, j: (b, h, i, j)),
            ],
            out_specs=pl.BlockSpec((1, 1, TQ, D), lambda b, h, i, j: (b, h, i, 0)),
            scratch_shapes=[
                pltpu.VMEM((TQ, D), jnp.float32),   # acc  (un-normalized out)
                pltpu.VMEM((TQ, 1), jnp.float32),   # rsum (abs-sum normalizer)
            ],
        ),
        compiler_params=pltpu.CompilerParams(
            dimension_semantics=("parallel", "parallel", "parallel", "arbitrary"),
            vmem_limit_bytes=vmem_limit,
        ),
    )(q, k, v, mask)


def ret_attention_ref(q, k, v, mask):
    qk = jnp.einsum("bhqd,bhkd->bhqk", q, k)
    qkm = qk * mask
    r = jnp.maximum(jnp.sum(jnp.abs(qkm), axis=-1, keepdims=True), 1.0)
    return jnp.einsum("bhqk,bhkd->bhqd", qkm / r, v)


if __name__ == "__main__":
    # Small deterministic shapes: batch=2, nheads=4, seqlen=16, head_dim=32.
    B, H, S, D = 2, 4, 16, 32
    key = jax.random.PRNGKey(0)
    kq, kk, kv = jax.random.split(key, 3)

    q = jax.random.normal(kq, (B, H, S, D), dtype=jnp.float32)
    k = jax.random.normal(kk, (B, H, S, D), dtype=jnp.float32)
    v = jax.random.normal(kv, (B, H, S, D), dtype=jnp.float32)

    # Retention-style lower-triangular decay mask (deterministic).
    gamma = 0.9
    idx = jnp.arange(S)
    decay = jnp.where(
        idx[:, None] >= idx[None, :],
        gamma ** (idx[:, None] - idx[None, :]).astype(jnp.float32),
        0.0,
    )
    mask = jnp.broadcast_to(decay, (B, H, S, S)).astype(jnp.float32)

    out = ret_attention(q, k, v, mask)
    out = jax.block_until_ready(out)

    ref = ret_attention_ref(q, k, v, mask)
    assert out.shape == (B, H, S, D)
    assert jnp.allclose(out, ref, atol=2e-5, rtol=2e-5)

    print("KERNEL_OK")
</pallas_src>

<mosaic_0001>
module attributes {stable_mosaic.version = 11 : i64} {
  func.func @ret_attention_kernel(%arg0: i32, %arg1: i32, %arg2: i32, %arg3: i32, %arg4: memref<1x1x16x32xf32, #tpu.memory_space<vmem>>, %arg5: memref<1x1x16x32xf32, #tpu.memory_space<vmem>>, %arg6: memref<1x1x16x32xf32, #tpu.memory_space<vmem>>, %arg7: memref<1x1x16x16xf32, #tpu.memory_space<vmem>>, %arg8: memref<1x1x16x32xf32, #tpu.memory_space<vmem>>, %arg9: memref<16x32xf32, #tpu.memory_space<vmem>>, %arg10: memref<16x1xf32, #tpu.memory_space<vmem>>) attributes {dimension_semantics = [#tpu.dimension_semantics<parallel>, #tpu.dimension_semantics<parallel>, #tpu.dimension_semantics<parallel>, #tpu.dimension_semantics<arbitrary>], iteration_bounds = array<i64: 2, 4, 1, 1>, scalar_prefetch = 0 : i64, scratch_operands = 2 : i64, tpu.core_type = #tpu.core_type<tc>, window_params = [{transform_indices = @transform_0, window_bounds = array<i64: 1, 1, 16, 32>}, {transform_indices = @transform_1, window_bounds = array<i64: 1, 1, 16, 32>}, {transform_indices = @transform_2, window_bounds = array<i64: 1, 1, 16, 32>}, {transform_indices = @transform_3, window_bounds = array<i64: 1, 1, 16, 16>}, {transform_indices = @transform_4, window_bounds = array<i64: 1, 1, 16, 32>}]} {
    %c0_i32 = arith.constant 0 : i32
    %0 = arith.cmpi eq, %arg3, %c0_i32 : i32
    %1 = arith.extui %0 : i1 to i32
    %c0_i32_0 = arith.constant 0 : i32
    %2 = arith.cmpi ne, %1, %c0_i32_0 : i32
    scf.if %2 {
      %cst_28 = arith.constant 0.000000e+00 : f32
      %26 = vector.broadcast %cst_28 : f32 to vector<16x32xf32>
      %c0_29 = arith.constant 0 : index
      %c0_30 = arith.constant 0 : index
      %27 = vector.load %arg9[%c0_29, %c0_30] : memref<16x32xf32, #tpu.memory_space<vmem>>, vector<16x32xf32>
      tpu.vector_store %arg9[%c0_29, %c0_30], %26 {strides = array<i32>} : memref<16x32xf32, #tpu.memory_space<vmem>>, vector<16x32xf32>,
      %cst_31 = arith.constant 0.000000e+00 : f32
      %28 = vector.broadcast %cst_31 : f32 to vector<16x1xf32>
      %c0_32 = arith.constant 0 : index
      %c0_33 = arith.constant 0 : index
      %29 = vector.load %arg10[%c0_32, %c0_33] : memref<16x1xf32, #tpu.memory_space<vmem>>, vector<16x1xf32>
      tpu.vector_store %arg10[%c0_32, %c0_33], %28 {strides = array<i32>} : memref<16x1xf32, #tpu.memory_space<vmem>>, vector<16x1xf32>,
    } else {
    }
    %c0 = arith.constant 0 : index
    %c0_1 = arith.constant 0 : index
    %c0_2 = arith.constant 0 : index
    %c0_3 = arith.constant 0 : index
    %3 = vector.load %arg4[%c0, %c0_1, %c0_2, %c0_3] : memref<1x1x16x32xf32, #tpu.memory_space<vmem>>, vector<1x1x16x32xf32>
    %4 = vector.shape_cast %3 : vector<1x1x16x32xf32> to vector<16x32xf32>
    %c0_4 = arith.constant 0 : index
    %c0_5 = arith.constant 0 : index
    %c0_6 = arith.constant 0 : index
    %c0_7 = arith.constant 0 : index
    %5 = vector.load %arg5[%c0_4, %c0_5, %c0_6, %c0_7] : memref<1x1x16x32xf32, #tpu.memory_space<vmem>>, vector<1x1x16x32xf32>
    %6 = vector.shape_cast %5 : vector<1x1x16x32xf32> to vector<16x32xf32>
    %c0_8 = arith.constant 0 : index
    %c0_9 = arith.constant 0 : index
    %c0_10 = arith.constant 0 : index
    %c0_11 = arith.constant 0 : index
    %7 = vector.load %arg6[%c0_8, %c0_9, %c0_10, %c0_11] : memref<1x1x16x32xf32, #tpu.memory_space<vmem>>, vector<1x1x16x32xf32>
    %8 = vector.shape_cast %7 : vector<1x1x16x32xf32> to vector<16x32xf32>
    %c0_12 = arith.constant 0 : index
    %c0_13 = arith.constant 0 : index
    %c0_14 = arith.constant 0 : index
    %c0_15 = arith.constant 0 : index
    %9 = vector.load %arg7[%c0_12, %c0_13, %c0_14, %c0_15] : memref<1x1x16x16xf32, #tpu.memory_space<vmem>>, vector<1x1x16x16xf32>
    %10 = vector.shape_cast %9 : vector<1x1x16x16xf32> to vector<16x16xf32>
    %cst = arith.constant dense<0.000000e+00> : vector<16x16xf32>
    %11 = tpu.matmul %4, %6, %cst {dimension_numbers = #tpu.dot_dimension_numbers<[1], [1], [0], [0], [0, 0, 1, 0], [], []>} : vector<16x32xf32>, vector<16x32xf32>, vector<16x16xf32> -> vector<16x16xf32>
    %12 = arith.mulf %11, %10 : vector<16x16xf32>
    %c0_16 = arith.constant 0 : index
    %c0_17 = arith.constant 0 : index
    %13 = vector.load %arg10[%c0_16, %c0_17] : memref<16x1xf32, #tpu.memory_space<vmem>>, vector<16x1xf32>
    %14 = math.absf %12 : vector<16x16xf32>
    %cst_18 = arith.constant dense<0.000000e+00> : vector<16xf32>
    %15 = vector.multi_reduction <add>, %14, %cst_18 [1] : vector<16x16xf32> to vector<16xf32>
    %16 = vector.shape_cast %15 : vector<16xf32> to vector<16x1xf32>
    %17 = arith.addf %13, %16 : vector<16x1xf32>
    %c0_19 = arith.constant 0 : index
    %c0_20 = arith.constant 0 : index
    %18 = vector.load %arg10[%c0_19, %c0_20] : memref<16x1xf32, #tpu.memory_space<vmem>>, vector<16x1xf32>
    tpu.vector_store %arg10[%c0_19, %c0_20], %17 {strides = array<i32>} : memref<16x1xf32, #tpu.memory_space<vmem>>, vector<16x1xf32>,
    %c0_21 = arith.constant 0 : index
    %c0_22 = arith.constant 0 : index
    %19 = vector.load %arg9[%c0_21, %c0_22] : memref<16x32xf32, #tpu.memory_space<vmem>>, vector<16x32xf32>
    %cst_23 = arith.constant dense<0.000000e+00> : vector<16x32xf32>
    %20 = tpu.matmul %12, %8, %cst_23 {dimension_numbers = #tpu.dot_dimension_numbers<[1], [0], [0], [1], [0, 0, 1, 1], [], []>} : vector<16x16xf32>, vector<16x32xf32>, vector<16x32xf32> -> vector<16x32xf32>
    %21 = arith.addf %19, %20 : vector<16x32xf32>
    %c0_24 = arith.constant 0 : index
    %c0_25 = arith.constant 0 : index
    %22 = vector.load %arg9[%c0_24, %c0_25] : memref<16x32xf32, #tpu.memory_space<vmem>>, vector<16x32xf32>
    tpu.vector_store %arg9[%c0_24, %c0_25], %21 {strides = array<i32>} : memref<16x32xf32, #tpu.memory_space<vmem>>, vector<16x32xf32>,
    %c0_i32_26 = arith.constant 0 : i32
    %23 = arith.cmpi eq, %arg3, %c0_i32_26 : i32
    %24 = arith.extui %23 : i1 to i32
    %c0_i32_27 = arith.constant 0 : i32
    %25 = arith.cmpi ne, %24, %c0_i32_27 : i32
    scf.if %25 {
      %c0_28 = arith.constant 0 : index
      %c0_29 = arith.constant 0 : index
      %26 = vector.load %arg10[%c0_28, %c0_29] : memref<16x1xf32, #tpu.memory_space<vmem>>, vector<16x1xf32>
      %cst_30 = arith.constant 1.000000e+00 : f32
      %27 = vector.broadcast %cst_30 : f32 to vector<16x1xf32>
      %28 = arith.maximumf %26, %27 : vector<16x1xf32>
      %c0_31 = arith.constant 0 : index
      %c0_32 = arith.constant 0 : index
      %29 = vector.load %arg9[%c0_31, %c0_32] : memref<16x32xf32, #tpu.memory_space<vmem>>, vector<16x32xf32>
      %30 = tpu.reciprocal %28 : vector<16x1xf32> -> vector<16x1xf32>
      %31 = vector.broadcast %30 : vector<16x1xf32> to vector<16x32xf32>
      %32 = arith.mulf %29, %31 : vector<16x32xf32>
      %c0_33 = arith.constant 0 : index
      %c0_34 = arith.constant 0 : index
      %c0_35 = arith.constant 0 : index
      %c0_36 = arith.constant 0 : index
      %33 = vector.load %arg8[%c0_33, %c0_34, %c0_35, %c0_36] : memref<1x1x16x32xf32, #tpu.memory_space<vmem>>, vector<1x1x16x32xf32>
      %34 = vector.shape_cast %33 : vector<1x1x16x32xf32> to vector<16x32xf32>
      %35 = vector.shape_cast %32 : vector<16x32xf32> to vector<1x1x16x32xf32>
      tpu.vector_store %arg8[%c0_33, %c0_34, %c0_35, %c0_36], %35 {strides = array<i32>} : memref<1x1x16x32xf32, #tpu.memory_space<vmem>>, vector<1x1x16x32xf32>,
    } else {
    }
    return
  }
  func.func @transform_0(%arg0: i32, %arg1: i32, %arg2: i32, %arg3: i32) -> (i32, i32, i32, i32) {
    %c0_i32 = arith.constant 0 : i32
    %c0_i32_0 = arith.constant 0 : i32
    return %arg0, %arg1, %arg2, %c0_i32 : i32, i32, i32, i32
  }
  func.func @transform_1(%arg0: i32, %arg1: i32, %arg2: i32, %arg3: i32) -> (i32, i32, i32, i32) {
    %c0_i32 = arith.constant 0 : i32
    %c0_i32_0 = arith.constant 0 : i32
    return %arg0, %arg1, %arg3, %c0_i32 : i32, i32, i32, i32
  }
  func.func @transform_2(%arg0: i32, %arg1: i32, %arg2: i32, %arg3: i32) -> (i32, i32, i32, i32) {
    %c0_i32 = arith.constant 0 : i32
    %c0_i32_0 = arith.constant 0 : i32
    return %arg0, %arg1, %arg3, %c0_i32 : i32, i32, i32, i32
  }
  func.func @transform_3(%arg0: i32, %arg1: i32, %arg2: i32, %arg3: i32) -> (i32, i32, i32, i32) {
    %c0_i32 = arith.constant 0 : i32
    return %arg0, %arg1, %arg2, %arg3 : i32, i32, i32, i32
  }
  func.func @transform_4(%arg0: i32, %arg1: i32, %arg2: i32, %arg3: i32) -> (i32, i32, i32, i32) {
    %c0_i32 = arith.constant 0 : i32
    %c0_i32_0 = arith.constant 0 : i32
    return %arg0, %arg1, %arg2, %c0_i32 : i32, i32, i32, i32
  }
}

</mosaic_0001>

<llo_original>
// kernel: tpu_custom_call.1
$region0: #{tpu_custom_call.1}
  #allocation0 [shape = 'u32[]', space=smem, size = 0x4, offset = 0x4, fixed_abs, tag = 'smem constant byte address 0x4 - core index']
  #allocation1 [shape = 'u32[72,128]{1,0:T(1,128)}', space=vmem, size = 0x9000, scoped, tag = 'internal scratch']
  #allocation2 [shape = 'f32[16,32]{1,0:T(8,128)}', space=vmem, size = 0x2000, scoped, tag = 'scratch operand']
  #allocation3 [shape = 'f32[16,1]{1,0:T(8,128)}', space=vmem, size = 0x2000, scoped, tag = 'scratch operand']
  %s0 = inlined_call_operand.hbm [shape: f32[2,4,16,32], index: 0, kind: input, shape index: {}]
  %s1 = inlined_call_operand.hbm [shape: f32[2,4,16,32], index: 1, kind: input, shape index: {}]
  %s2 = inlined_call_operand.hbm [shape: f32[2,4,16,32], index: 2, kind: input, shape index: {}]
  %s3 = inlined_call_operand.hbm [shape: f32[2,4,16,16], index: 3, kind: input, shape index: {}]
  %s4 = inlined_call_operand.hbm [shape: f32[2,4,16,32], index: 4, kind: output, shape index: {}]
  %s5 = sld [smem:[#allocation0]]
  $region73: #{tpu_custom_call.1} parent=0
    _
  %s7 = ssub.s32 1, %s5
  %s8 = scalar_select 0, %s7, %s5
  $region1: #{tpu_custom_call.1} parent=0
    #allocation4 [shape = 'u8[16384]{0}', space=vmem, size = 0x4000, scoped, tag = 'input window, operand 0']
    #allocation5 [shape = 's32[2]{0}', space=sflag, size = 0x8, scoped, tag = 'scoped memory for tpu_custom_call.1']
    #allocation6 [shape = 's32[2]{0}', space=sflag, size = 0x8, scoped, tag = 'scoped memory for tpu_custom_call.1']
    #allocation7 [shape = 'u8[16384]{0}', space=vmem, size = 0x4000, scoped, tag = 'input window, operand 1']
    #allocation8 [shape = 's32[2]{0}', space=sflag, size = 0x8, scoped, tag = 'scoped memory for tpu_custom_call.1']
    #allocation9 [shape = 'u8[16384]{0}', space=vmem, size = 0x4000, scoped, tag = 'input window, operand 2']
    #allocation10 [shape = 'u8[16384]{0}', space=vmem, size = 0x4000, scoped, tag = 'input window, operand 3']
    #allocation11 [shape = 's32[2]{0}', space=sflag, size = 0x8, scoped, tag = 'scoped memory for tpu_custom_call.1']
    #allocation12 [shape = 'u8[16384]{0}', space=vmem, size = 0x4000, scoped, tag = 'output window, operand 0']
    %9 = vsyncpa [#allocation5], 0
    %s10 = scalar_lea.sflag [#allocation5], 1
    %11 = vsyncpa %s10, 0
    %12 = vsyncpa [#allocation8], 0
    %s13 = scalar_lea.sflag [#allocation8], 1
    %14 = vsyncpa %s13, 0
    %15 = vsyncpa [#allocation11], 0
    %s16 = scalar_lea.sflag [#allocation11], 1
    %17 = vsyncpa %s16, 0
    %18 = vsyncpa [#allocation6], 0
    %s19 = scalar_lea.sflag [#allocation6], 1
    %20 = vsyncpa %s19, 0
    loop: start=0, step=1, limit=10
    $region2: #{tpu_custom_call.1} parent=1 // loop_pre_header
      _
    $region3: #{tpu_custom_call.1} parent=1 // loop_header
      %s22 = sphi 0, %s26
      %p23 = scmp.ge.s32.totalorder %s22, 10
      %s29 = sphi 0, %s55
      %s30 = sphi 0, %s51
      %s31 = sphi 0, %s47
      %s32 = sphi 0, %s43
      %s33 = sphi 0, %s29
      %s34 = sphi 0, %s30
      %s35 = sphi 0, %s31
      %s36 = sphi 0, %s32
      %s37 = sphi 0, %s33
      %s38 = sphi 0, %s34
      %s39 = sphi 0, %s35
      %s40 = sphi 0, %s36
      %s62 = sphi 0, %s64
      %s65 = sphi 0, %s62
      %s66 = sphi 0, %s65
      %s82 = sphi 0, %s66
      %s92 = sphi 0, %s94
      %s95 = sphi 0, %s92
      %s96 = sphi 0, %s95
      %s112 = sphi 0, %s96
      %s122 = sphi 0, %s124
      %s125 = sphi 0, %s122
      %s126 = sphi 0, %s125
      %s142 = sphi 0, %s126
      %s154 = sphi 0, %s156
      %s157 = sphi 0, %s154
      %s158 = sphi 0, %s157
      %s174 = sphi 0, %s158
      %s184 = sphi 0, %s186
      %s187 = sphi 0, %s184
      %s188 = sphi 0, %s187
      %s204 = sphi 0, %s188
    $region4: #{tpu_custom_call.1} parent=1 // loop_header_branch
      %25 = sbr.rel (%p23) target = $region8
    $region5: #{tpu_custom_call.1} parent=1 // loop_body
      %s27 = ssub.s32 %s22, 1
      %s28 = ssub.s32 %s22, 2
      %s41 = sadd.s32 1, %s32
      %p42 = scmp.ge.s32.totalorder %s41, 1
      %s43 = scalar_select %p42, 0, %s41
      %s44 = sadd.s32 1, %s31
      %s45 = scalar_select %p42, %s44, %s31
      %p46 = scmp.ge.s32.totalorder %s45, 1
      %s47 = scalar_select %p46, 0, %s45
      %s48 = sadd.s32 1, %s30
      %s49 = scalar_select %p46, %s48, %s30
      %p50 = scmp.ge.s32.totalorder %s49, 4
      %s51 = scalar_select %p50, 0, %s49
      %s52 = sadd.s32 1, %s29
      %s53 = scalar_select %p50, %s52, %s29
      %p54 = scmp.ge.s32.totalorder %s53, 2
      %s55 = scalar_select %p54, 0, %s53
      %s56 = ssub.s32 %s29, %s55
      %s57 = ssub.s32 %s30, %s51
      %s58 = sor.u32 %s56, %s57
      %s59 = ssub.s32 %s31, %s47
      %s60 = sor.u32 %s58, %s59
      %p61 = scmp.eq.s32.totalorder %s60, 0
      %s63 = sadd.s32 %s62, 1
      %s64 = scalar_select %p61, %s62, %s63
      %p67 = pneg %p61
      %p68 = scmp.eq.s32.totalorder %s22, 7
      %p69 = por %p67, %p68
      %p70 = scmp.ne.s32.totalorder %s62, %s65
      %p71 = scmp.eq.s32.totalorder %s22, 0
      %p72 = por %p70, %p71
      %p73 = scmp.ne.s32.totalorder %s62, %s65
      %p74 = scmp.eq.s32.totalorder %s27, 7
      %p75 = por %p73, %p74
      %p76 = scmp.ne.s32.totalorder %s65, %s66
      %p77 = scmp.eq.s32.totalorder %s27, 0
      %p78 = por %p76, %p77
      %p79 = scmp.ne.s32.totalorder %s65, %s66
      %p80 = scmp.eq.s32.totalorder %s28, 7
      %p81 = por %p79, %p80
      %p83 = scmp.ne.s32.totalorder %s66, %s82
      %p84 = scmp.eq.s32.totalorder %s28, 0
      %p85 = por %p83, %p84
      %s86 = ssub.s32 %s29, %s55
      %s87 = ssub.s32 %s30, %s51
      %s88 = sor.u32 %s86, %s87
      %s89 = ssub.s32 %s32, %s43
      %s90 = sor.u32 %s88, %s89
      %p91 = scmp.eq.s32.totalorder %s90, 0
      %s93 = sadd.s32 %s92, 1
      %s94 = scalar_select %p91, %s92, %s93
      %p97 = pneg %p91
      %p98 = scmp.eq.s32.totalorder %s22, 7
      %p99 = por %p97, %p98
      %p100 = scmp.ne.s32.totalorder %s92, %s95
      %p101 = scmp.eq.s32.totalorder %s22, 0
      %p102 = por %p100, %p101
      %p103 = scmp.ne.s32.totalorder %s92, %s95
      %p104 = scmp.eq.s32.totalorder %s27, 7
      %p105 = por %p103, %p104
      %p106 = scmp.ne.s32.totalorder %s95, %s96
      %p107 = scmp.eq.s32.totalorder %s27, 0
      %p108 = por %p106, %p107
      %p109 = scmp.ne.s32.totalorder %s95, %s96
      %p110 = scmp.eq.s32.totalorder %s28, 7
      %p111 = por %p109, %p110
      %p113 = scmp.ne.s32.totalorder %s96, %s112
      %p114 = scmp.eq.s32.totalorder %s28, 0
      %p115 = por %p113, %p114
      %s116 = ssub.s32 %s29, %s55
      %s117 = ssub.s32 %s30, %s51
      %s118 = sor.u32 %s116, %s117
      %s119 = ssub.s32 %s32, %s43
      %s120 = sor.u32 %s118, %s119
      %p121 = scmp.eq.s32.totalorder %s120, 0
      %s123 = sadd.s32 %s122, 1
      %s124 = scalar_select %p121, %s122, %s123
      %p127 = pneg %p121
      %p128 = scmp.eq.s32.totalorder %s22, 7
      %p129 = por %p127, %p128
      %p130 = scmp.ne.s32.totalorder %s122, %s125
      %p131 = scmp.eq.s32.totalorder %s22, 0
      %p132 = por %p130, %p131
      %p133 = scmp.ne.s32.totalorder %s122, %s125
      %p134 = scmp.eq.s32.totalorder %s27, 7
      %p135 = por %p133, %p134
      %p136 = scmp.ne.s32.totalorder %s125, %s126
      %p137 = scmp.eq.s32.totalorder %s27, 0
      %p138 = por %p136, %p137
      %p139 = scmp.ne.s32.totalorder %s125, %s126
      %p140 = scmp.eq.s32.totalorder %s28, 7
      %p141 = por %p139, %p140
      %p143 = scmp.ne.s32.totalorder %s126, %s142
      %p144 = scmp.eq.s32.totalorder %s28, 0
      %p145 = por %p143, %p144
      %s146 = ssub.s32 %s29, %s55
      %s147 = ssub.s32 %s30, %s51
      %s148 = sor.u32 %s146, %s147
      %s149 = ssub.s32 %s31, %s47
      %s150 = sor.u32 %s148, %s149
      %s151 = ssub.s32 %s32, %s43
      %s152 = sor.u32 %s150, %s151
      %p153 = scmp.eq.s32.totalorder %s152, 0
      %s155 = sadd.s32 %s154, 1
      %s156 = scalar_select %p153, %s154, %s155
      %p159 = pneg %p153
      %p160 = scmp.eq.s32.totalorder %s22, 7
      %p161 = por %p159, %p160
      %p162 = scmp.ne.s32.totalorder %s154, %s157
      %p163 = scmp.eq.s32.totalorder %s22, 0
      %p164 = por %p162, %p163
      %p165 = scmp.ne.s32.totalorder %s154, %s157
      %p166 = scmp.eq.s32.totalorder %s27, 7
      %p167 = por %p165, %p166
      %p168 = scmp.ne.s32.totalorder %s157, %s158
      %p169 = scmp.eq.s32.totalorder %s27, 0
      %p170 = por %p168, %p169
      %p171 = scmp.ne.s32.totalorder %s157, %s158
      %p172 = scmp.eq.s32.totalorder %s28, 7
      %p173 = por %p171, %p172
      %p175 = scmp.ne.s32.totalorder %s158, %s174
      %p176 = scmp.eq.s32.totalorder %s28, 0
      %p177 = por %p175, %p176
      %s178 = ssub.s32 %s29, %s55
      %s179 = ssub.s32 %s30, %s51
      %s180 = sor.u32 %s178, %s179
      %s181 = ssub.s32 %s31, %s47
      %s182 = sor.u32 %s180, %s181
      %p183 = scmp.eq.s32.totalorder %s182, 0
      %s185 = sadd.s32 %s184, 1
      %s186 = scalar_select %p183, %s184, %s185
      %p189 = pneg %p183
      %p190 = scmp.eq.s32.totalorder %s22, 7
      %p191 = por %p189, %p190
      %p192 = scmp.ne.s32.totalorder %s184, %s187
      %p193 = scmp.eq.s32.totalorder %s22, 0
      %p194 = por %p192, %p193
      %p195 = scmp.ne.s32.totalorder %s184, %s187
      %p196 = scmp.eq.s32.totalorder %s27, 7
      %p197 = por %p195, %p196
      %p198 = scmp.ne.s32.totalorder %s187, %s188
      %p199 = scmp.eq.s32.totalorder %s27, 0
      %p200 = por %p198, %p199
      %p201 = scmp.ne.s32.totalorder %s187, %s188
      %p202 = scmp.eq.s32.totalorder %s28, 7
      %p203 = por %p201, %p202
      %p205 = scmp.ne.s32.totalorder %s188, %s204
      %p206 = scmp.eq.s32.totalorder %s28, 0
      %p207 = por %p205, %p206
      %p208 = scmp.le.s32.totalorder 1, %s22
      %p209 = scmp.lt.s32.totalorder %s22, 9
      %p210 = pnand %p208, %p209
      %p211 = pneg %p210
      // Predicated region
      $region9: #{tpu_custom_call.1} parent=5 // pred_check
        _
      $region10: #{tpu_custom_call.1} parent=5 // pred_check_branch
        %213 = sbr.rel (%p210) target = $region12
      $region11: #{tpu_custom_call.1} parent=5 // pred_region
        %s214 = ssub.s32 %s22, 1
      $region12: #{tpu_custom_call.1} parent=5 // pred_fallthru
        _
      %p215 = scmp.lt.s32.totalorder %s22, 8
      // Predicated region
      $region13: #{tpu_custom_call.1} parent=5 // pred_check
        %p216 = pneg %p215
      $region14: #{tpu_custom_call.1} parent=5 // pred_check_branch
        %218 = sbr.rel (%p216) target = $region16
      $region15: #{tpu_custom_call.1} parent=5 // pred_region
        // Predicated region
        $region17: #{tpu_custom_call.1} parent=15 // pred_check
          %p219 = pneg %p72
        $region18: #{tpu_custom_call.1} parent=15 // pred_check_branch
          %221 = sbr.rel (%p219) target = $region20
        $region19: #{tpu_custom_call.1} parent=15 // pred_region
          %s222 = sand.u32 %s62, 1
          %s223 = scalar_lea.sflag [#allocation5], %s222
          %s224 = sand.u32 %s62, 1
          %s225 = smul.addr %s224, 16
          %s226 = scalar_lea.vmem [#allocation4], %s225
          %s227 = smul.u32 2, %s31
          %229 = vsyncadd %s223, 0
          %s230 = smul.addr %s30, 2
          %s231 = sadd.s32 %s227, %s230
          %s232 = smul.addr %s29, 8
          %s233 = sadd.s32 %s231, %s232
          %s234 = smul.addr %s233, 8
          %s235 = scalar_lea.hbm %s0, %s234
          %s236 = sshll.u32 %s235, 4
          %s237 = int_to_ptr.hbm [resolvable:$true] %s236
          %s238 = sshll.u32 %s226, 4
          %s239 = int_to_ptr.vmem [resolvable:$true] %s238
          %244 = dma.hbm_to_vmem [thread:$0]  %s237, 256, %s239, %s223, 128, 128, 8
        $region20: #{tpu_custom_call.1} parent=15 // pred_fallthru
          _
        // Predicated region
        $region21: #{tpu_custom_call.1} parent=15 // pred_check
          %p245 = pneg %p102
        $region22: #{tpu_custom_call.1} parent=15 // pred_check_branch
          %247 = sbr.rel (%p245) target = $region24
        $region23: #{tpu_custom_call.1} parent=15 // pred_region
          %s248 = sand.u32 %s22, 1
          %s249 = scalar_lea.sflag [#allocation8], %s248
          %s250 = sand.u32 %s92, 1
          %s251 = smul.addr %s250, 16
          %s252 = scalar_lea.vmem [#allocation7], %s251
          %s253 = smul.u32 2, %s32
          %255 = vsyncadd %s249, 0
          %s256 = smul.addr %s30, 2
          %s257 = sadd.s32 %s253, %s256
          %s258 = smul.addr %s29, 8
          %s259 = sadd.s32 %s257, %s258
          %s260 = smul.addr %s259, 8
          %s261 = scalar_lea.hbm %s1, %s260
          %s262 = sshll.u32 %s261, 4
          %s263 = int_to_ptr.hbm [resolvable:$true] %s262
          %s264 = sshll.u32 %s252, 4
          %s265 = int_to_ptr.vmem [resolvable:$true] %s264
          %270 = dma.hbm_to_vmem [thread:$0]  %s263, 256, %s265, %s249, 128, 128, 8
        $region24: #{tpu_custom_call.1} parent=15 // pred_fallthru
          _
        // Predicated region
        $region25: #{tpu_custom_call.1} parent=15 // pred_check
          %p271 = pneg %p132
        $region26: #{tpu_custom_call.1} parent=15 // pred_check_branch
          %273 = sbr.rel (%p271) target = $region28
        $region27: #{tpu_custom_call.1} parent=15 // pred_region
          %s274 = sand.u32 %s22, 1
          %s275 = scalar_lea.sflag [#allocation8], %s274
          %s276 = sand.u32 %s122, 1
          %s277 = smul.addr %s276, 16
          %s278 = scalar_lea.vmem [#allocation9], %s277
          %s279 = smul.u32 2, %s32
          %281 = vsyncadd %s275, 0
          %s282 = smul.addr %s30, 2
          %s283 = sadd.s32 %s279, %s282
          %s284 = smul.addr %s29, 8
          %s285 = sadd.s32 %s283, %s284
          %s286 = smul.addr %s285, 8
          %s287 = scalar_lea.hbm %s2, %s286
          %s288 = sshll.u32 %s287, 4
          %s289 = int_to_ptr.hbm [resolvable:$true] %s288
          %s290 = sshll.u32 %s278, 4
          %s291 = int_to_ptr.vmem [resolvable:$true] %s290
          %296 = dma.hbm_to_vmem [thread:$0]  %s289, 256, %s291, %s275, 128, 128, 8
        $region28: #{tpu_custom_call.1} parent=15 // pred_fallthru
          _
        // Predicated region
        $region29: #{tpu_custom_call.1} parent=15 // pred_check
          %p297 = pneg %p164
        $region30: #{tpu_custom_call.1} parent=15 // pred_check_branch
          %299 = sbr.rel (%p297) target = $region32
        $region31: #{tpu_custom_call.1} parent=15 // pred_region
          %s300 = sand.u32 %s154, 1
          %s301 = scalar_lea.sflag [#allocation11], %s300
          %s302 = sand.u32 %s154, 1
          %s303 = smul.addr %s302, 16
          %s304 = scalar_lea.vmem [#allocation10], %s303
          %s305 = smul.u32 2, %s31
          %307 = vsyncadd %s301, 0
          %s308 = sadd.s32 %s32, %s305
          %s309 = smul.addr %s30, 2
          %s310 = sadd.s32 %s308, %s309
          %s311 = smul.addr %s29, 8
          %s312 = sadd.s32 %s310, %s311
          %s313 = smul.addr %s312, 8
          %s314 = scalar_lea.hbm %s3, %s313
          %s315 = sshll.u32 %s314, 4
          %s316 = int_to_ptr.hbm [resolvable:$true] %s315
          %s317 = sshll.u32 %s304, 4
          %s318 = int_to_ptr.vmem [resolvable:$true] %s317
          %323 = dma.hbm_to_vmem [thread:$0]  %s316, 256, %s318, %s301, 128, 128, 8
        $region32: #{tpu_custom_call.1} parent=15 // pred_fallthru
          _
      $region16: #{tpu_custom_call.1} parent=5 // pred_fallthru
        _
      %p324 = scmp.le.s32.totalorder 1, %s22
      %p325 = scmp.lt.s32.totalorder %s22, 9
      %p326 = pnand %p324, %p325
      %p327 = pneg %p326
      // Predicated region
      $region33: #{tpu_custom_call.1} parent=5 // pred_check
        _
      $region34: #{tpu_custom_call.1} parent=5 // pred_check_branch
        %329 = sbr.rel (%p326) target = $region36
      $region35: #{tpu_custom_call.1} parent=5 // pred_region
        %s330 = ssub.s32 %s22, 1
        %s331 = sand.u32 %s65, 1
        %s332 = scalar_lea.sflag [#allocation5], %s331
        %s333 = sand.u32 %s65, 1
        %s334 = smul.addr %s333, 16
        %s335 = scalar_lea.vmem [#allocation4], %s334
        // Predicated region
        $region37: #{tpu_custom_call.1} parent=35 // pred_check
          %p336 = pneg %p78
        $region38: #{tpu_custom_call.1} parent=35 // pred_check_branch
          %338 = sbr.rel (%p336) target = $region40
        $region39: #{tpu_custom_call.1} parent=35 // pred_region
          %340 = dma.done %s332, 256
        $region40: #{tpu_custom_call.1} parent=35 // pred_fallthru
          _
        %s341 = sand.u32 %s27, 1
        %s342 = scalar_lea.sflag [#allocation8], %s341
        %s343 = sand.u32 %s95, 1
        %s344 = smul.addr %s343, 16
        %s345 = scalar_lea.vmem [#allocation7], %s344
        // Predicated region
        $region41: #{tpu_custom_call.1} parent=35 // pred_check
          %p346 = pneg %p108
        $region42: #{tpu_custom_call.1} parent=35 // pred_check_branch
          %348 = sbr.rel (%p346) target = $region44
        $region43: #{tpu_custom_call.1} parent=35 // pred_region
          %350 = dma.done %s342, 256
        $region44: #{tpu_custom_call.1} parent=35 // pred_fallthru
          _
        %s351 = sand.u32 %s27, 1
        %s352 = scalar_lea.sflag [#allocation8], %s351
        %s353 = sand.u32 %s125, 1
        %s354 = smul.addr %s353, 16
        %s355 = scalar_lea.vmem [#allocation9], %s354
        // Predicated region
        $region45: #{tpu_custom_call.1} parent=35 // pred_check
          %p356 = pneg %p138
        $region46: #{tpu_custom_call.1} parent=35 // pred_check_branch
          %358 = sbr.rel (%p356) target = $region48
        $region47: #{tpu_custom_call.1} parent=35 // pred_region
          %360 = dma.done %s352, 256
        $region48: #{tpu_custom_call.1} parent=35 // pred_fallthru
          _
        %s361 = sand.u32 %s157, 1
        %s362 = scalar_lea.sflag [#allocation11], %s361
        %s363 = sand.u32 %s157, 1
        %s364 = smul.addr %s363, 16
        %s365 = scalar_lea.vmem [#allocation10], %s364
        // Predicated region
        $region49: #{tpu_custom_call.1} parent=35 // pred_check
          %p366 = pneg %p170
        $region50: #{tpu_custom_call.1} parent=35 // pred_check_branch
          %368 = sbr.rel (%p366) target = $region52
        $region51: #{tpu_custom_call.1} parent=35 // pred_region
          %370 = dma.done %s362, 256
        $region52: #{tpu_custom_call.1} parent=35 // pred_fallthru
          _
        %s371 = sand.u32 %s65, 1
        %s372 = scalar_lea.sflag [#allocation5], %s371
        %s373 = sand.u32 %s65, 1
        %s374 = smul.addr %s373, 16
        %s375 = scalar_lea.vmem [#allocation4], %s374
        %p376 = pneg %p78
        %p377 = pneg %p75
        %s378 = sand.u32 %s27, 1
        %s379 = scalar_lea.sflag [#allocation8], %s378
        %s380 = sand.u32 %s95, 1
        %s381 = smul.addr %s380, 16
        %s382 = scalar_lea.vmem [#allocation7], %s381
        %p383 = pneg %p108
        %p384 = pneg %p105
        %s385 = sand.u32 %s27, 1
        %s386 = scalar_lea.sflag [#allocation8], %s385
        %s387 = sand.u32 %s125, 1
        %s388 = smul.addr %s387, 16
        %s389 = scalar_lea.vmem [#allocation9], %s388
        %p390 = pneg %p138
        %p391 = pneg %p135
        %s392 = sand.u32 %s157, 1
        %s393 = scalar_lea.sflag [#allocation11], %s392
        %s394 = sand.u32 %s157, 1
        %s395 = smul.addr %s394, 16
        %s396 = scalar_lea.vmem [#allocation10], %s395
        %p397 = pneg %p170
        %p398 = pneg %p167
        %p399 = pneg %p200
        %p400 = pneg %p197
        %s401 = sand.u32 %s187, 1
        %s402 = scalar_lea.sflag [#allocation6], %s401
        %s403 = sand.u32 %s187, 1
        %s404 = smul.addr %s403, 16
        %s405 = scalar_lea.vmem [#allocation12], %s404
        %s406 = smul.u32 2, %s35
        %s407 = smul.u32 2, %s36
        %s408 = smul.u32 2, %s36
        %s409 = smul.u32 2, %s35
        %s410 = smul.u32 2, %s35
        %p411 = scmp.eq.s32.totalorder %s36, 0
        // Predicated region
        $region53: #{tpu_custom_call.1} parent=35 // pred_check
          %p412 = pneg %p411
        $region54: #{tpu_custom_call.1} parent=35 // pred_check_branch
          %414 = sbr.rel (%p412) target = $region56
        $region55: #{tpu_custom_call.1} parent=35 // pred_region
          %vm415 = vcmask 261120
          %416 = vst.msk [vmem:[#allocation2] sm:$0xff] %vm415, 0.0
          %417 = vst.msk [vmem:[#allocation2 + $0x8] sm:$0xff] %vm415, 0.0
          %vm418 = vcmask 7168
          %419 = vst.msk [vmem:[#allocation3] sm:$0xff] %vm418, 0.0
          %420 = vst.msk [vmem:[#allocation3 + $0x8] sm:$0xff] %vm418, 0.0
        $region56: #{tpu_custom_call.1} parent=35 // pred_fallthru
          _
        %v421 = vld [vmem:[%s335] sm:$0xff]
        %v422 = vld [vmem:[%s335 + $0x8] sm:$0xff]
        %v423 = vld [vmem:[%s345] sm:$0xff]
        %v424 = vld [vmem:[%s345 + $0x8] sm:$0xff]
        %v425 = vld [vmem:[%s355] sm:$0xff]
        %v426 = vld [vmem:[%s355 + $0x8] sm:$0xff]
        %v427 = vld [vmem:[%s365] sm:$0xff]
        %v428 = vld [vmem:[%s365 + $0x8] sm:$0xff]
        %vm429 = vcmask 261120
        %v431 = vsel %vm429, %v421, 0
        %v434 = vsel %vm429, %v422, 0
        %v437 = vsel %vm429, %v423, 0
        %v440 = vsel %vm429, %v424, 0
        %442 = vmatpush.xpose.msra.mxu0 0.0
        %443 = vmatpush.xpose.msra.mxu0 0.0
        %444 = vmatpush.xpose.msra.mxu0 0.0
        %445 = vmatpush.xpose.msra.mxu0 0.0
        %446 = vmatpush.xpose.msra.mxu0 0.0
        %447 = vmatpush.xpose.msra.mxu0 0.0
        %448 = vmatpush.xpose.msra.mxu0 0.0
        %449 = vmatpush.xpose.msra.mxu0 0.0
        %450 = vmatpush.xpose.msra.mxu0 0.0
        %451 = vmatpush.xpose.msra.mxu0 0.0
        %452 = vmatpush.xpose.msra.mxu0 0.0
        %453 = vmatpush.xpose.msra.mxu0 0.0
        %454 = vmatpush.xpose.msra.mxu0 0.0
        %455 = vmatpush.xpose.msra.mxu0 0.0
        %456 = vmatpush.xpose.msra.mxu0 %v440
        %457 = vmatpush.xpose.msra.mxu0 %v437
        %458 = vmatmul.f32.gmra.mxu0 %v431
        %v459 = vpop.f32.mrf.mxu0
        %v460 = vadd.f32 0.0, %v459
        %461 = vmatmul.f32.gmra.mxu0 %v434
        %v462 = vpop.f32.mrf.mxu0
        %v463 = vadd.f32 0.0, %v462
        %464 = vdwg.mxu0
        %v465 = vmul.f32 %v460, %v427
        %v466 = vmul.f32 %v463, %v428
        %v467 = vld [vmem:[#allocation3] sm:$0xff]
        %v468 = vld [vmem:[#allocation3 + $0x8] sm:$0xff]
        %v469 = vand.u32 2147483647, %v465
        %v470 = vand.u32 2147483647, %v466
        %vm471 = vcmask 130048
        %v472 = vsel %vm471, %v469, 0.0
        %473 = vadd.xlane.f32.xlu0 %v472
        %v474 = vpop.xlane.xlu0 %473
        %v475 = vsel %vm471, %v470, 0.0
        %476 = vadd.xlane.f32.xlu0 %v475
        %v477 = vpop.xlane.xlu0 %476
        %v478 = vadd.f32 %v467, %v474
        %v479 = vadd.f32 %v468, %v477
        %vm480 = vcmask 7168
        %481 = vst.msk [vmem:[#allocation3] sm:$0xff] %vm480, %v478
        %482 = vst.msk [vmem:[#allocation3 + $0x8] sm:$0xff] %vm480, %v479
        %v483 = vld [vmem:[#allocation2] sm:$0xff]
        %v484 = vld [vmem:[#allocation2 + $0x8] sm:$0xff]
        %v486 = vsel %vm471, %v465, 0
        %v489 = vsel %vm471, %v466, 0
        %491 = vmatpush.msra.mxu0 0.0
        %492 = vmatpush.msra.mxu0 0.0
        %493 = vmatpush.msra.mxu0 0.0
        %494 = vmatpush.msra.mxu0 0.0
        %495 = vmatpush.msra.mxu0 0.0
        %496 = vmatpush.msra.mxu0 0.0
        %497 = vmatpush.msra.mxu0 0.0
        %498 = vmatpush.msra.mxu0 0.0
        %499 = vmatpush.msra.mxu0 0.0
        %500 = vmatpush.msra.mxu0 0.0
        %501 = vmatpush.msra.mxu0 0.0
        %502 = vmatpush.msra.mxu0 0.0
        %503 = vmatpush.msra.mxu0 0.0
        %504 = vmatpush.msra.mxu0 0.0
        %505 = vmatpush.msra.mxu0 %v426
        %506 = vmatpush.msra.mxu0 %v425
        %507 = vmatmul.f32.gmra.mxu0 %v486
        %v508 = vpop.f32.mrf.mxu0
        %v509 = vadd.f32 0.0, %v508
        %510 = vmatmul.f32.gmra.mxu0 %v489
        %v511 = vpop.f32.mrf.mxu0
        %v512 = vadd.f32 0.0, %v511
        %513 = vdwg.mxu0
        %v514 = vadd.f32 %v483, %v509
        %v515 = vadd.f32 %v484, %v512
        %516 = vst.msk [vmem:[#allocation2] sm:$0xff] %vm429, %v514
        %517 = vst.msk [vmem:[#allocation2 + $0x8] sm:$0xff] %vm429, %v515
        // Predicated region
        $region57: #{tpu_custom_call.1} parent=35 // pred_check
          %p518 = pneg %p411
        $region58: #{tpu_custom_call.1} parent=35 // pred_check_branch
          %520 = sbr.rel (%p518) target = $region60
        $region59: #{tpu_custom_call.1} parent=35 // pred_region
          %v521 = vld [vmem:[#allocation3] sm:$0xff]
          %v522 = vld [vmem:[#allocation3 + $0x8] sm:$0xff]
          %v523 = vmax.f32 %v521, 1.0
          %v524 = vmax.f32 %v522, 1.0
          %v525 = vld [vmem:[#allocation2] sm:$0xff]
          %v526 = vld [vmem:[#allocation2 + $0x8] sm:$0xff]
          %v527 = vrcp.pop %v523
          %v528 = vmul.f32 %v523, %v527
          %v529 = vsub.f32 1.0, %v528
          %v530 = vmul.f32 %v527, %v529
          %v531 = vadd.f32 %v527, %v530
          %vm532 = vweird.f32 %v523
          %vm533 = vweird.f32 %v527
          %vm534 = vmor %vm532, %vm533
          %v535 = vsel %vm534, %v527, %v531
          %v536 = vand.u32 2147483647, %v523
          %vm537 = vcmp.eq.f32.partialorder %v536, 8.507059e+37
          %v538 = vand.u32 %v523, 2147483648
          %v539 = vor.u32 1.1754944e-38, %v538
          %v540 = vsel %vm537, %v539, %v535
          %v541 = vrcp.pop %v524
          %v542 = vmul.f32 %v524, %v541
          %v543 = vsub.f32 1.0, %v542
          %v544 = vmul.f32 %v541, %v543
          %v545 = vadd.f32 %v541, %v544
          %vm546 = vweird.f32 %v524
          %vm547 = vweird.f32 %v541
          %vm548 = vmor %vm546, %vm547
          %v549 = vsel %vm548, %v541, %v545
          %v550 = vand.u32 2147483647, %v524
          %vm551 = vcmp.eq.f32.partialorder %v550, 8.507059e+37
          %v552 = vand.u32 %v524, 2147483648
          %v553 = vor.u32 1.1754944e-38, %v552
          %v554 = vsel %vm551, %v553, %v549
          %556 = vset.pattern.permute.xlu0 0
          %557 = vperm.xlu0 %556, %v540
          %v558 = vpop.permute.xlu0 %557
          %561 = vset.pattern.permute.xlu0 0
          %562 = vperm.xlu0 %561, %v554
          %v563 = vpop.permute.xlu0 %562
          %v565 = vmul.f32 %v525, %v558
          %v566 = vmul.f32 %v526, %v563
          %567 = vst.msk [vmem:[%s405] sm:$0xff] %vm429, %v565
          %568 = vst.msk [vmem:[%s405 + $0x8] sm:$0xff] %vm429, %v566
        $region60: #{tpu_custom_call.1} parent=35 // pred_fallthru
          _
        %s569 = sand.u32 %s187, 1
        %s570 = scalar_lea.sflag [#allocation6], %s569
        %s571 = sand.u32 %s187, 1
        %s572 = smul.addr %s571, 16
        %s573 = scalar_lea.vmem [#allocation12], %s572
        // Predicated region
        $region61: #{tpu_custom_call.1} parent=35 // pred_check
          %p574 = pneg %p197
        $region62: #{tpu_custom_call.1} parent=35 // pred_check_branch
          %576 = sbr.rel (%p574) target = $region64
        $region63: #{tpu_custom_call.1} parent=35 // pred_region
          %s577 = smul.u32 2, %s35
          %579 = vsyncadd %s570, 0
          %s580 = smul.addr %s34, 2
          %s581 = sadd.s32 %s577, %s580
          %s582 = smul.addr %s33, 8
          %s583 = sadd.s32 %s581, %s582
          %s584 = smul.addr %s583, 8
          %s585 = scalar_lea.hbm %s4, %s584
          %s586 = sshll.u32 %s573, 4
          %s587 = int_to_ptr.vmem [resolvable:$true] %s586
          %s588 = sshll.u32 %s585, 4
          %s589 = int_to_ptr.hbm [resolvable:$true] %s588
          %594 = dma.vmem_to_hbm [thread:$0]  %s587, 256, %s589, %s570, 128, 128, 8
        $region64: #{tpu_custom_call.1} parent=35 // pred_fallthru
          _
      $region36: #{tpu_custom_call.1} parent=5 // pred_fallthru
        _
      %p595 = scmp.le.s32.totalorder 2, %s22
      // Predicated region
      $region65: #{tpu_custom_call.1} parent=5 // pred_check
        %p596 = pneg %p595
      $region66: #{tpu_custom_call.1} parent=5 // pred_check_branch
        %598 = sbr.rel (%p596) target = $region68
      $region67: #{tpu_custom_call.1} parent=5 // pred_region
        %s599 = ssub.s32 %s22, 2
        // Predicated region
        $region69: #{tpu_custom_call.1} parent=67 // pred_check
          %p600 = pneg %p203
        $region70: #{tpu_custom_call.1} parent=67 // pred_check_branch
          %602 = sbr.rel (%p600) target = $region72
        $region71: #{tpu_custom_call.1} parent=67 // pred_region
          %s603 = sand.u32 %s188, 1
          %s604 = scalar_lea.sflag [#allocation6], %s603
          %s605 = sand.u32 %s188, 1
          %s606 = smul.addr %s605, 16
          %s607 = scalar_lea.vmem [#allocation12], %s606
          %609 = dma.done %s604, 256
        $region72: #{tpu_custom_call.1} parent=67 // pred_fallthru
          _
      $region68: #{tpu_custom_call.1} parent=5 // pred_fallthru
        _
    $region6: #{tpu_custom_call.1} parent=1 // loop_footer
      %s26 = sadd.s32 1, %s22
    $region7: #{tpu_custom_call.1} parent=1 // loop_footer_branch
      %21 = sbr.rel target = $region3
    $region8: #{tpu_custom_call.1} parent=1 // loop_exit
      _
    %610 = vsyncpa [#allocation5], 1
    %s611 = scalar_lea.sflag [#allocation5], 1
    %612 = vsyncpa %s611, 1
    %613 = vsyncpa [#allocation8], 1
    %s614 = scalar_lea.sflag [#allocation8], 1
    %615 = vsyncpa %s614, 1
    %616 = vsyncpa [#allocation11], 1
    %s617 = scalar_lea.sflag [#allocation11], 1
    %618 = vsyncpa %s617, 1
    %619 = vsyncpa [#allocation6], 1
    %s620 = scalar_lea.sflag [#allocation6], 1
    %621 = vsyncpa %s620, 1

</llo_original>
